<compile_context>
chip_gen: v7x
topology: tpu7x:2x2x1
jax: 0.10.0
libtpu: 0.0.40
codegen_flags: <defaults>
</compile_context>

<pallas_src>
import functools

import jax
import jax.numpy as jnp
from jax.experimental import pallas as pl
from jax.experimental.pallas import tpu as pltpu

EPS = 1e-6
LANES = 128
SUBLANES = 8
CHUNK_ROWS = 512  # 512 x 128 x 4 B = 256 KiB f32 streamed per sub-chunk


def _tpu_config():
    """Returns (num_explicit_cores, target_block_rows) per TPU generation."""
    try:
        kind = jax.devices()[0].device_kind.lower()
    except Exception:
        kind = ""
    if "v7" in kind:
        # 2 TensorCores/chip: shard the reduction across both TCs with an
        # explicit leading "parallel" axis. 8192 rows = 4 MiB f32 per input
        # tile -> 16 MiB with 2 inputs x 2 pipeline buffers (fits 64 MiB VMEM).
        return 2, 8192
    if "v5 lite" in kind or "v5lite" in kind or "v5e" in kind:
        # 1 TC/chip, smaller default scoped VMEM: 4096-row tiles (8 MiB total).
        return 1, 4096
    # v6e and anything else: 1 explicit core axis, big tiles.
    return 1, 8192


def _charbonnier_kernel(x_ref, y_ref, o_ref, *, rows_valid, block_rows,
                        chunk_rows, steps_per_core):
    c = pl.program_id(0)          # explicit core ("parallel") axis
    i = pl.program_id(1)          # sequential reduction axis

    # o_ref is this core's resident (8,128) accumulator block.
    @pl.when(i == 0)
    def _():
        o_ref[...] = jnp.zeros_like(o_ref)

    # Logical (unclamped) block index; duplicate (index-map-clamped) trailing
    # blocks on the core axis fall into the masked path and contribute zero.
    blk = c * steps_per_core + i
    blk_row0 = blk * block_rows            # row units -> no int32 overflow
    num_chunks = block_rows // chunk_rows  # static; block_rows % chunk_rows == 0

    def _chunk_err(k):
        r0 = pl.multiple_of(k * chunk_rows, chunk_rows)
        xd = x_ref[pl.ds(r0, chunk_rows), :].astype(jnp.float32)
        yd = y_ref[pl.ds(r0, chunk_rows), :].astype(jnp.float32)
        d = xd - yd
        return r0, jnp.sqrt(d * d + EPS)

    # Fast path: every row of this tile is valid -> no iota / where in the hot
    # loop; stream sub-chunks and accumulate into one vreg-shaped (8,128)
    # carry (keeps the intermediate bounded instead of a 4 MiB `err` slab).
    @pl.when(blk_row0 + block_rows <= rows_valid)
    def _():
        def body(k, acc):
            _, e = _chunk_err(k)
            return acc + e.reshape(-1, SUBLANES, LANES).sum(axis=0)
        o_ref[...] += jax.lax.fori_loop(
            0, num_chunks, body, jnp.zeros((SUBLANES, LANES), jnp.float32))

    # Ragged tail / duplicate tiles: mask per ROW against rows_valid (never
    # forms flat element indices, so safe for huge tensors).  Garbage rows of
    # a partial last block are selected away by the where().
    @pl.when(blk_row0 + block_rows > rows_valid)
    def _():
        def body(k, acc):
            r0, e = _chunk_err(k)
            row_ids = jax.lax.broadcasted_iota(jnp.int32, (chunk_rows, LANES), 0)
            valid = (blk_row0 + r0 + row_ids) < rows_valid
            e = jnp.where(valid, e, 0.0)
            return acc + e.reshape(-1, SUBLANES, LANES).sum(axis=0)
        o_ref[...] += jax.lax.fori_loop(
            0, num_chunks, body, jnp.zeros((SUBLANES, LANES), jnp.float32))


def l1_charbonnier_loss(x, y):
    assert x.shape == y.shape
    n_valid = int(x.size)
    num_cores, target_rows = _tpu_config()

    xf = jnp.ravel(x)
    yf = jnp.ravel(y)

    # Lane-aligned prefix goes through the Pallas kernel (zero-copy reshape in
    # the aligned case).  The <128-element ragged remainder is summed in plain
    # JAX — no full-array jnp.pad copy of potentially multi-GB tensors.
    n_tail = n_valid % LANES
    n_main = n_valid - n_tail

    tail_sum = jnp.float32(0.0)
    if n_tail:
        xt = xf[n_main:].astype(jnp.float32)
        yt = yf[n_main:].astype(jnp.float32)
        dt = xt - yt
        tail_sum = jnp.sum(jnp.sqrt(dt * dt + EPS))

    rows = n_main // LANES
    if rows == 0:
        return tail_sum / jnp.float32(n_valid)

    # Tile sizing: block_rows is always a multiple of chunk_rows (and of 8).
    if rows >= CHUNK_ROWS:
        block_rows = min(target_rows, pl.cdiv(rows, CHUNK_ROWS) * CHUNK_ROWS)
        chunk_rows = CHUNK_ROWS
    else:
        block_rows = pl.cdiv(rows, SUBLANES) * SUBLANES
        chunk_rows = block_rows

    x2d = xf[:n_main].reshape(rows, LANES)   # layout-preserving reshape
    y2d = yf[:n_main].reshape(rows, LANES)

    num_blocks = pl.cdiv(rows, block_rows)
    if num_blocks < num_cores:
        num_cores = 1                        # skip useless core axis work
    steps_per_core = pl.cdiv(num_blocks, num_cores)

    def in_map(c, i):
        # Clamp so trailing duplicate tiles (when num_blocks doesn't split
        # evenly over cores) re-read an in-bounds block; the kernel masks
        # them to zero.
        return (jnp.minimum(c * steps_per_core + i, num_blocks - 1), 0)

    kernel = functools.partial(
        _charbonnier_kernel,
        rows_valid=rows,
        block_rows=block_rows,
        chunk_rows=chunk_rows,
        steps_per_core=steps_per_core,
    )

    cost = pl.CostEstimate(
        flops=4 * n_valid,
        transcendentals=n_valid,
        bytes_accessed=int(x.nbytes) + int(y.nbytes),
    )

    partials = pl.pallas_call(
        kernel,
        out_shape=jax.ShapeDtypeStruct((num_cores, SUBLANES, LANES), jnp.float32),
        grid_spec=pltpu.PrefetchScalarGridSpec(
            num_scalar_prefetch=0,
            grid=(num_cores, steps_per_core),
            in_specs=[
                pl.BlockSpec((block_rows, LANES), in_map),
                pl.BlockSpec((block_rows, LANES), in_map),
            ],
            # Per-core accumulator block, resident across the "arbitrary" axis.
            out_specs=pl.BlockSpec((None, SUBLANES, LANES), lambda c, i: (c, 0, 0)),
        ),
        compiler_params=pltpu.CompilerParams(
            dimension_semantics=("parallel", "arbitrary"),
            vmem_limit_bytes=32 * 1024 * 1024,
        ),
        cost_estimate=cost,
    )(x2d, y2d)

    # Final tiny reduction + mean in the wrapper.
    return (jnp.sum(partials) + tail_sum) / jnp.float32(n_valid)


if __name__ == "__main__":
    key = jax.random.PRNGKey(0)
    kx, ky = jax.random.split(key)

    # NCHW inputs, like the PyTorch module would receive (prediction, target).
    x = jax.random.normal(kx, (2, 4, 16, 16), dtype=jnp.float32)
    y = jax.random.normal(ky, (2, 4, 16, 16), dtype=jnp.float32)
    loss = jax.block_until_ready(l1_charbonnier_loss(x, y))
    ref = jnp.mean(jnp.sqrt((x - y) ** 2 + EPS))
    assert jnp.allclose(loss, ref, rtol=1e-5, atol=1e-6), (loss, ref)

    # Ragged case: size % 128 != 0 and rows % block_rows != 0 (exercises the
    # masked tail path + pure-JAX remainder).
    k2, k3 = jax.random.split(ky)
    x2 = jax.random.normal(k2, (3, 5, 7, 11), dtype=jnp.float32)
    y2 = jax.random.normal(k3, (3, 5, 7, 11), dtype=jnp.float32)
    loss2 = jax.block_until_ready(l1_charbonnier_loss(x2, y2))
    ref2 = jnp.mean(jnp.sqrt((x2 - y2) ** 2 + EPS))
    assert jnp.allclose(loss2, ref2, rtol=1e-5, atol=1e-6), (loss2, ref2)

    print("KERNEL_OK")
</pallas_src>

<mosaic_0001>
module attributes {stable_mosaic.version = 11 : i64} {
  func.func @_charbonnier_kernel(%arg0: i32, %arg1: i32, %arg2: memref<16x128xf32, #tpu.memory_space<vmem>>, %arg3: memref<16x128xf32, #tpu.memory_space<vmem>>, %arg4: memref<1x8x128xf32, #tpu.memory_space<vmem>>) attributes {dimension_semantics = [#tpu.dimension_semantics<parallel>, #tpu.dimension_semantics<arbitrary>], iteration_bounds = array<i64: 1, 1>, scalar_prefetch = 0 : i64, scratch_operands = 0 : i64, tpu.core_type = #tpu.core_type<tc>, window_params = [{transform_indices = @transform_0, window_bounds = array<i64: 16, 128>}, {transform_indices = @transform_1, window_bounds = array<i64: 16, 128>}, {transform_indices = @transform_2, window_bounds = array<i64: 1, 8, 128>}]} {
    %c0_i32 = arith.constant 0 : i32
    %0 = arith.cmpi eq, %arg1, %c0_i32 : i32
    %1 = arith.extui %0 : i1 to i32
    %c0_i32_0 = arith.constant 0 : i32
    %2 = arith.cmpi ne, %1, %c0_i32_0 : i32
    scf.if %2 {
      %cst = arith.constant 0.000000e+00 : f32
      %14 = vector.broadcast %cst : f32 to vector<8x128xf32>
      %c0 = arith.constant 0 : index
      %c0_7 = arith.constant 0 : index
      %c0_8 = arith.constant 0 : index
      %15 = vector.load %arg4[%c0, %c0_7, %c0_8] : memref<1x8x128xf32, #tpu.memory_space<vmem>>, vector<1x8x128xf32>
      %16 = vector.shape_cast %15 : vector<1x8x128xf32> to vector<8x128xf32>
      %17 = vector.shape_cast %14 : vector<8x128xf32> to vector<1x8x128xf32>
      tpu.vector_store %arg4[%c0, %c0_7, %c0_8], %17 {strides = array<i32>} : memref<1x8x128xf32, #tpu.memory_space<vmem>>, vector<1x8x128xf32>,
    } else {
    }
    %c1_i32 = arith.constant 1 : i32
    %3 = arith.muli %arg0, %c1_i32 : i32
    %4 = arith.addi %3, %arg1 : i32
    %c16_i32 = arith.constant 16 : i32
    %5 = arith.muli %4, %c16_i32 : i32
    %c16_i32_1 = arith.constant 16 : i32
    %6 = arith.addi %5, %c16_i32_1 : i32
    %c16_i32_2 = arith.constant 16 : i32
    %7 = arith.cmpi sle, %6, %c16_i32_2 : i32
    %8 = arith.extui %7 : i1 to i32
    %c0_i32_3 = arith.constant 0 : i32
    %9 = arith.cmpi ne, %8, %c0_i32_3 : i32
    scf.if %9 {
      %c0 = arith.constant 0 : index
      %c0_7 = arith.constant 0 : index
      %c0_8 = arith.constant 0 : index
      %14 = vector.load %arg4[%c0, %c0_7, %c0_8] : memref<1x8x128xf32, #tpu.memory_space<vmem>>, vector<1x8x128xf32>
      %15 = vector.shape_cast %14 : vector<1x8x128xf32> to vector<8x128xf32>
      %cst = arith.constant 0.000000e+00 : f32
      %16 = vector.broadcast %cst : f32 to vector<8x128xf32>
      %c0_i32_9 = arith.constant 0 : i32
      %c16_i32_10 = arith.constant 16 : i32
      %17 = arith.muli %c0_i32_9, %c16_i32_10 : i32
      %18 = tpu.assume_multiple %17, 16 : i32
      %19 = arith.index_cast %18 : i32 to index
      %c0_11 = arith.constant 0 : index
      %20 = vector.load %arg2[%19, %c0_11] : memref<16x128xf32, #tpu.memory_space<vmem>>, vector<16x128xf32>
      %21 = arith.index_cast %18 : i32 to index
      %c0_12 = arith.constant 0 : index
      %22 = vector.load %arg3[%21, %c0_12] : memref<16x128xf32, #tpu.memory_space<vmem>>, vector<16x128xf32>
      %23 = arith.subf %20, %22 : vector<16x128xf32>
      %24 = arith.mulf %23, %23 : vector<16x128xf32>
      %cst_13 = arith.constant 9.99999997E-7 : f32
      %25 = vector.broadcast %cst_13 : f32 to vector<16x128xf32>
      %26 = arith.addf %24, %25 : vector<16x128xf32>
      %27 = math.sqrt %26 : vector<16x128xf32>
      %28 = vector.shape_cast %27 : vector<16x128xf32> to vector<2x8x128xf32>
      %cst_14 = arith.constant dense<0.000000e+00> : vector<8x128xf32>
      %29 = vector.multi_reduction <add>, %28, %cst_14 [0] : vector<2x8x128xf32> to vector<8x128xf32>
      %30 = arith.addf %16, %29 : vector<8x128xf32>
      %c1_i32_15 = arith.constant 1 : i32
      %31 = arith.addf %15, %30 : vector<8x128xf32>
      %c0_16 = arith.constant 0 : index
      %c0_17 = arith.constant 0 : index
      %c0_18 = arith.constant 0 : index
      %32 = vector.load %arg4[%c0_16, %c0_17, %c0_18] : memref<1x8x128xf32, #tpu.memory_space<vmem>>, vector<1x8x128xf32>
      %33 = vector.shape_cast %32 : vector<1x8x128xf32> to vector<8x128xf32>
      %34 = vector.shape_cast %31 : vector<8x128xf32> to vector<1x8x128xf32>
      tpu.vector_store %arg4[%c0_16, %c0_17, %c0_18], %34 {strides = array<i32>} : memref<1x8x128xf32, #tpu.memory_space<vmem>>, vector<1x8x128xf32>,
    } else {
    }
    %c16_i32_4 = arith.constant 16 : i32
    %10 = arith.addi %5, %c16_i32_4 : i32
    %c16_i32_5 = arith.constant 16 : i32
    %11 = arith.cmpi sgt, %10, %c16_i32_5 : i32
    %12 = arith.extui %11 : i1 to i32
    %c0_i32_6 = arith.constant 0 : i32
    %13 = arith.cmpi ne, %12, %c0_i32_6 : i32
    scf.if %13 {
      %c0 = arith.constant 0 : index
      %c0_7 = arith.constant 0 : index
      %c0_8 = arith.constant 0 : index
      %14 = vector.load %arg4[%c0, %c0_7, %c0_8] : memref<1x8x128xf32, #tpu.memory_space<vmem>>, vector<1x8x128xf32>
      %15 = vector.shape_cast %14 : vector<1x8x128xf32> to vector<8x128xf32>
      %cst = arith.constant 0.000000e+00 : f32
      %16 = vector.broadcast %cst : f32 to vector<8x128xf32>
      %c0_i32_9 = arith.constant 0 : i32
      %c16_i32_10 = arith.constant 16 : i32
      %17 = arith.muli %c0_i32_9, %c16_i32_10 : i32
      %18 = tpu.assume_multiple %17, 16 : i32
      %19 = arith.index_cast %18 : i32 to index
      %c0_11 = arith.constant 0 : index
      %20 = vector.load %arg2[%19, %c0_11] : memref<16x128xf32, #tpu.memory_space<vmem>>, vector<16x128xf32>
      %21 = arith.index_cast %18 : i32 to index
      %c0_12 = arith.constant 0 : index
      %22 = vector.load %arg3[%21, %c0_12] : memref<16x128xf32, #tpu.memory_space<vmem>>, vector<16x128xf32>
      %23 = arith.subf %20, %22 : vector<16x128xf32>
      %24 = arith.mulf %23, %23 : vector<16x128xf32>
      %cst_13 = arith.constant 9.99999997E-7 : f32
      %25 = vector.broadcast %cst_13 : f32 to vector<16x128xf32>
      %26 = arith.addf %24, %25 : vector<16x128xf32>
      %27 = math.sqrt %26 : vector<16x128xf32>
      %28 = tpu.iota {dimensions = array<i32: 0>} : vector<16x128xi32>
      %29 = arith.addi %5, %18 : i32
      %30 = vector.broadcast %29 : i32 to vector<16x128xi32>
      %31 = arith.addi %30, %28 : vector<16x128xi32>
      %c16_i32_14 = arith.constant 16 : i32
      %32 = vector.broadcast %c16_i32_14 : i32 to vector<16x128xi32>
      %33 = arith.cmpi slt, %31, %32 : vector<16x128xi32>
      %cst_15 = arith.constant 0.000000e+00 : f32
      %34 = vector.broadcast %cst_15 : f32 to vector<16x128xf32>
      %35 = arith.select %33, %27, %34 : vector<16x128xi1>, vector<16x128xf32>
      %36 = vector.shape_cast %35 : vector<16x128xf32> to vector<2x8x128xf32>
      %cst_16 = arith.constant dense<0.000000e+00> : vector<8x128xf32>
      %37 = vector.multi_reduction <add>, %36, %cst_16 [0] : vector<2x8x128xf32> to vector<8x128xf32>
      %38 = arith.addf %16, %37 : vector<8x128xf32>
      %c1_i32_17 = arith.constant 1 : i32
      %39 = arith.addf %15, %38 : vector<8x128xf32>
      %c0_18 = arith.constant 0 : index
      %c0_19 = arith.constant 0 : index
      %c0_20 = arith.constant 0 : index
      %40 = vector.load %arg4[%c0_18, %c0_19, %c0_20] : memref<1x8x128xf32, #tpu.memory_space<vmem>>, vector<1x8x128xf32>
      %41 = vector.shape_cast %40 : vector<1x8x128xf32> to vector<8x128xf32>
      %42 = vector.shape_cast %39 : vector<8x128xf32> to vector<1x8x128xf32>
      tpu.vector_store %arg4[%c0_18, %c0_19, %c0_20], %42 {strides = array<i32>} : memref<1x8x128xf32, #tpu.memory_space<vmem>>, vector<1x8x128xf32>,
    } else {
    }
    return
  }
  func.func @transform_0(%arg0: i32, %arg1: i32) -> (i32, i32) {
    %c1_i32 = arith.constant 1 : i32
    %0 = arith.muli %arg0, %c1_i32 : i32
    %1 = arith.addi %0, %arg1 : i32
    %c0_i32 = arith.constant 0 : i32
    %2 = arith.minsi %1, %c0_i32 : i32
    %c0_i32_0 = arith.constant 0 : i32
    %c0_i32_1 = arith.constant 0 : i32
    return %2, %c0_i32_0 : i32, i32
  }
  func.func @transform_1(%arg0: i32, %arg1: i32) -> (i32, i32) {
    %c1_i32 = arith.constant 1 : i32
    %0 = arith.muli %arg0, %c1_i32 : i32
    %1 = arith.addi %0, %arg1 : i32
    %c0_i32 = arith.constant 0 : i32
    %2 = arith.minsi %1, %c0_i32 : i32
    %c0_i32_0 = arith.constant 0 : i32
    %c0_i32_1 = arith.constant 0 : i32
    return %2, %c0_i32_0 : i32, i32
  }
  func.func @transform_2(%arg0: i32, %arg1: i32) -> (i32, i32, i32) {
    %c0_i32 = arith.constant 0 : i32
    %c0_i32_0 = arith.constant 0 : i32
    %c0_i32_1 = arith.constant 0 : i32
    return %arg0, %c0_i32, %c0_i32_0 : i32, i32, i32
  }
}

</mosaic_0001>

<llo_original>
// kernel: tpu_custom_call.1
$region0: #{tpu_custom_call.1}
  #allocation0 [shape = 'u32[]', space=smem, size = 0x4, offset = 0x4, fixed_abs, tag = 'smem constant byte address 0x4 - core index']
  #allocation1 [shape = 'u32[144,128]{1,0:T(1,128)}', space=vmem, size = 0x12000, scoped, tag = 'internal scratch']
  %s0 = inlined_call_operand.hbm [shape: f32[16,128], index: 0, kind: input, shape index: {}]
  %s1 = inlined_call_operand.hbm [shape: f32[16,128], index: 1, kind: input, shape index: {}]
  %s2 = inlined_call_operand.hbm [shape: f32[1,8,128], index: 2, kind: output, shape index: {}]
  %s3 = sld [smem:[#allocation0]]
  $region38: #{tpu_custom_call.1} parent=0
    _
  %s5 = ssub.s32 1, %s3
  %s6 = scalar_select 0, %s5, %s3
  $region1: #{tpu_custom_call.1} parent=0
    #allocation2 [shape = 'u8[8192]{0}', space=vmem, size = 0x2000, scoped, tag = 'input window, operand 0, single buffered']
    #allocation3 [shape = 's32[1]{0}', space=sflag, size = 0x4, scoped, tag = 'scoped memory for tpu_custom_call.1']
    #allocation4 [shape = 's32[1]{0}', space=sflag, size = 0x4, scoped, tag = 'scoped memory for tpu_custom_call.1']
    #allocation5 [shape = 'u8[8192]{0}', space=vmem, size = 0x2000, scoped, tag = 'input window, operand 1, single buffered']
    #allocation6 [shape = 's32[1]{0}', space=sflag, size = 0x4, scoped, tag = 'scoped memory for tpu_custom_call.1']
    #allocation7 [shape = 'u8[4096]{0}', space=vmem, size = 0x1000, scoped, tag = 'output window, operand 0, single buffered']
    %7 = vsyncpa [#allocation3], 0
    %8 = vsyncpa [#allocation6], 0
    %9 = vsyncpa [#allocation4], 0
    // Predicated region
    $region2: #{tpu_custom_call.1} parent=1 // pred_check
      _
    $region3: #{tpu_custom_call.1} parent=1 // pred_check_branch
      %11 = sbr.rel (0) target = $region5
    $region4: #{tpu_custom_call.1} parent=1 // pred_region
      %s12 = sadd.s32 0, 0
      %p13 = scmp.lt.s32.totalorder %s12, 0
      %s14 = scalar_select %p13, %s12, 0
      %s15 = smul.u32 2, %s14
      %s17 = ssub.s32 256, 256
      %18 = vsyncadd [#allocation3], %s17
      %s19 = smul.addr %s15, 128
      %s20 = scalar_lea.hbm %s0, %s19
      %s21 = sshll.u32 [#allocation2], 4
      %s22 = int_to_ptr.vmem [resolvable:$true] %s21
      %27 = dma.hbm_to_vmem [thread:$0]  %s20, 256, %s22, [#allocation3], 128, 128, 8
    $region5: #{tpu_custom_call.1} parent=1 // pred_fallthru
      _
    // Predicated region
    $region6: #{tpu_custom_call.1} parent=1 // pred_check
      _
    $region7: #{tpu_custom_call.1} parent=1 // pred_check_branch
      %29 = sbr.rel (0) target = $region9
    $region8: #{tpu_custom_call.1} parent=1 // pred_region
      %s30 = sadd.s32 0, 0
      %p31 = scmp.lt.s32.totalorder %s30, 0
      %s32 = scalar_select %p31, %s30, 0
      %s33 = smul.u32 2, %s32
      %s35 = ssub.s32 256, 256
      %36 = vsyncadd [#allocation6], %s35
      %s37 = smul.addr %s33, 128
      %s38 = scalar_lea.hbm %s1, %s37
      %s39 = sshll.u32 [#allocation5], 4
      %s40 = int_to_ptr.vmem [resolvable:$true] %s39
      %45 = dma.hbm_to_vmem [thread:$0]  %s38, 256, %s40, [#allocation6], 128, 128, 8
    $region9: #{tpu_custom_call.1} parent=1 // pred_fallthru
      _
    // Predicated region
    $region10: #{tpu_custom_call.1} parent=1 // pred_check
      _
    $region11: #{tpu_custom_call.1} parent=1 // pred_check_branch
      %47 = sbr.rel (0) target = $region13
    $region12: #{tpu_custom_call.1} parent=1 // pred_region
      %48 = dma.done [#allocation3], 256
    $region13: #{tpu_custom_call.1} parent=1 // pred_fallthru
      _
    // Predicated region
    $region14: #{tpu_custom_call.1} parent=1 // pred_check
      _
    $region15: #{tpu_custom_call.1} parent=1 // pred_check_branch
      %50 = sbr.rel (0) target = $region17
    $region16: #{tpu_custom_call.1} parent=1 // pred_region
      %51 = dma.done [#allocation6], 256
    $region17: #{tpu_custom_call.1} parent=1 // pred_fallthru
      _
    %s52 = sadd.s32 0, 0
    %p53 = scmp.lt.s32.totalorder %s52, 0
    %s54 = scalar_select %p53, %s52, 0
    %s55 = smul.u32 2, %s54
    %s56 = sadd.s32 0, 0
    %p57 = scmp.lt.s32.totalorder %s56, 0
    %s58 = scalar_select %p57, %s56, 0
    %s59 = smul.u32 2, %s58
    %p60 = scmp.eq.s32.totalorder 0, 0
    // Predicated region
    $region18: #{tpu_custom_call.1} parent=1 // pred_check
      %p61 = pneg %p60
    $region19: #{tpu_custom_call.1} parent=1 // pred_check_branch
      %63 = sbr.rel (%p61) target = $region21
    $region20: #{tpu_custom_call.1} parent=1 // pred_region
      %64 = vst [vmem:[#allocation7] sm:$0xff] 0.0
    $region21: #{tpu_custom_call.1} parent=1 // pred_fallthru
      _
    %s65 = sadd.s32 0, 0
    %s66 = smul.u32 %s65, 16
    %s67 = sadd.s32 %s66, 16
    %p68 = scmp.le.s32.totalorder %s67, 16
    // Predicated region
    $region22: #{tpu_custom_call.1} parent=1 // pred_check
      %p69 = pneg %p68
    $region23: #{tpu_custom_call.1} parent=1 // pred_check_branch
      %71 = sbr.rel (%p69) target = $region25
    $region24: #{tpu_custom_call.1} parent=1 // pred_region
      %v72 = vld [vmem:[#allocation7] sm:$0xff]
      %v73 = vld [vmem:[#allocation2] sm:$0xff]
      %v74 = vld [vmem:[#allocation2 + $0x8] sm:$0xff]
      %v75 = vld [vmem:[#allocation5] sm:$0xff]
      %v76 = vld [vmem:[#allocation5 + $0x8] sm:$0xff]
      %v77 = vsub.f32 %v73, %v75
      %v78 = vsub.f32 %v74, %v76
      %v79 = vmul.f32 %v77, %v77
      %v80 = vmul.f32 %v78, %v78
      %v81 = vadd.f32 %v79, 1e-06
      %v82 = vadd.f32 %v80, 1e-06
      %v83 = vrsqrt.pop %v81
      %v84 = vmul.f32 %v81, %v83
      %vm85 = vcmp.eq.f32.partialorder %v81, inf
      %v86 = vsel %vm85, %v81, %v84
      %vm87 = vcmp.eq.f32.partialorder %v81, 0.0
      %v88 = vand.u32 %v81, 2147483648
      %v89 = vsel %vm87, %v88, %v86
      %v90 = vrsqrt.pop %v82
      %v91 = vmul.f32 %v82, %v90
      %vm92 = vcmp.eq.f32.partialorder %v82, inf
      %v93 = vsel %vm92, %v82, %v91
      %vm94 = vcmp.eq.f32.partialorder %v82, 0.0
      %v95 = vand.u32 %v82, 2147483648
      %v96 = vsel %vm94, %v95, %v93
      %v97 = vadd.f32 %v89, %v96
      %v98 = vadd.f32 %v97, 0.0
      %v99 = vadd.f32 %v72, %v98
      %100 = vst [vmem:[#allocation7] sm:$0xff] %v99
    $region25: #{tpu_custom_call.1} parent=1 // pred_fallthru
      _
    %p101 = scmp.gt.s32.totalorder %s67, 16
    // Predicated region
    $region26: #{tpu_custom_call.1} parent=1 // pred_check
      %p102 = pneg %p101
    $region27: #{tpu_custom_call.1} parent=1 // pred_check_branch
      %104 = sbr.rel (%p102) target = $region29
    $region28: #{tpu_custom_call.1} parent=1 // pred_region
      %v105 = vld [vmem:[#allocation7] sm:$0xff]
      %v106 = vld [vmem:[#allocation2] sm:$0xff]
      %v107 = vld [vmem:[#allocation2 + $0x8] sm:$0xff]
      %v108 = vld [vmem:[#allocation5] sm:$0xff]
      %v109 = vld [vmem:[#allocation5 + $0x8] sm:$0xff]
      %v110 = vsub.f32 %v106, %v108
      %v111 = vsub.f32 %v107, %v109
      %v112 = vmul.f32 %v110, %v110
      %v113 = vmul.f32 %v111, %v111
      %v114 = vadd.f32 %v112, 1e-06
      %v115 = vadd.f32 %v113, 1e-06
      %v116 = vrsqrt.pop %v114
      %v117 = vmul.f32 %v114, %v116
      %vm118 = vcmp.eq.f32.partialorder %v114, inf
      %v119 = vsel %vm118, %v114, %v117
      %vm120 = vcmp.eq.f32.partialorder %v114, 0.0
      %v121 = vand.u32 %v114, 2147483648
      %v122 = vsel %vm120, %v121, %v119
      %v123 = vrsqrt.pop %v115
      %v124 = vmul.f32 %v115, %v123
      %vm125 = vcmp.eq.f32.partialorder %v115, inf
      %v126 = vsel %vm125, %v115, %v124
      %vm127 = vcmp.eq.f32.partialorder %v115, 0.0
      %v128 = vand.u32 %v115, 2147483648
      %v129 = vsel %vm127, %v128, %v126
      %v130 = vlaneseq
      %v131 = vshrl.u32 %v130, 7
      %v132 = vadd.s32 %v131, 8
      %s133 = sadd.s32 %s66, 0
      %v134 = vstv %s133
      %v135 = vadd.s32 %v134, %v131
      %v136 = vadd.s32 %v134, %v132
      %vm137 = vcmp.lt.s32.totalorder %v135, 16
      %vm138 = vcmp.lt.s32.totalorder %v136, 16
      %v139 = vsel %vm137, %v122, 0.0
      %v140 = vsel %vm138, %v129, 0.0
      %v141 = vadd.f32 %v139, %v140
      %v142 = vadd.f32 %v141, 0.0
      %v143 = vadd.f32 %v105, %v142
      %144 = vst [vmem:[#allocation7] sm:$0xff] %v143
    $region29: #{tpu_custom_call.1} parent=1 // pred_fallthru
      _
    // Predicated region
    $region30: #{tpu_custom_call.1} parent=1 // pred_check
      _
    $region31: #{tpu_custom_call.1} parent=1 // pred_check_branch
      %146 = sbr.rel (0) target = $region33
    $region32: #{tpu_custom_call.1} parent=1 // pred_region
      %s148 = ssub.s32 128, 128
      %149 = vsyncadd [#allocation4], %s148
      %s151 = sshll.u32 [#allocation7], 4
      %s152 = int_to_ptr.vmem [resolvable:$true] %s151
      %154 = dma.vmem_to_hbm [thread:$0]  %s152, 128, %s2, [#allocation4]
    $region33: #{tpu_custom_call.1} parent=1 // pred_fallthru
      _
    // Predicated region
    $region34: #{tpu_custom_call.1} parent=1 // pred_check
      _
    $region35: #{tpu_custom_call.1} parent=1 // pred_check_branch
      %156 = sbr.rel (0) target = $region37
    $region36: #{tpu_custom_call.1} parent=1 // pred_region
      %157 = dma.done [#allocation4], 128
    $region37: #{tpu_custom_call.1} parent=1 // pred_fallthru
      _
    %158 = vsyncpa [#allocation3], 1
    %159 = vsyncpa [#allocation6], 1
    %160 = vsyncpa [#allocation4], 1

</llo_original>
